<compile_context>
chip_gen: v7x
topology: tpu7x:2x2x1
jax: 0.10.0
libtpu: 0.0.40
codegen_flags: <defaults>
</compile_context>

<pallas_src>
import jax
import jax.numpy as jnp
from jax import lax
from jax.experimental import pallas as pl
from jax.experimental.pallas import tpu as pltpu


def _make_fbeta_kernel(beta: float, small_value: float, C: int, TC: int):
    beta2 = float(beta) * float(beta)
    sv = float(small_value)
    needs_col_mask = (C % TC) != 0  # static: only emit masking when needed

    def kernel(logits_ref, labels_ref, fs_ref, npos_acc, nhat_acc, tp_acc):
        j = pl.program_id(1)

        @pl.when(j == 0)
        def _():
            npos_acc[...] = jnp.zeros_like(npos_acc)
            nhat_acc[...] = jnp.zeros_like(nhat_acc)
            tp_acc[...] = jnp.zeros_like(tp_acc)

        # (TB, TC) tile: rows -> sublanes, classes -> lanes. Compute in f32
        # (matches the f32 PyTorch reference; kernel is HBM-bound anyway).
        x = logits_ref[...].astype(jnp.float32)
        l = labels_ref[...].astype(jnp.float32)
        p = jax.nn.sigmoid(x)                                # EUP

        if needs_col_mask:
            # Ragged last column tile: zero out padded lanes so the garbage
            # (possibly NaN) cannot leak into the row sums.
            cols = j * TC + lax.broadcasted_iota(jnp.int32, p.shape, 1)
            valid = cols < C
            p = jnp.where(valid, p, 0.0)
            l = jnp.where(valid, l, 0.0)

        npos_acc[...] += jnp.sum(p, axis=1, keepdims=True)   # XLU reduces
        nhat_acc[...] += jnp.sum(l, axis=1, keepdims=True)
        tp_acc[...] += jnp.sum(l * p, axis=1, keepdims=True)

        @pl.when(j == pl.num_programs(1) - 1)
        def _():
            # Divides only touch (TB, 1) vectors -> exact division is cheap.
            num_pos = npos_acc[...] + sv
            num_pos_hat = nhat_acc[...] + sv
            tp = tp_acc[...]
            precise = tp / num_pos
            recall = tp / num_pos_hat
            fs = (1.0 + beta2) * precise * recall / (
                beta2 * precise + recall + sv)
            fs_ref[...] = fs.astype(fs_ref.dtype)

    return kernel


def _round_down(x: int, m: int) -> int:
    return (x // m) * m


def _round_up(x: int, m: int) -> int:
    return -(-x // m) * m


_SUBLANE = {1: 32, 2: 16, 4: 8}  # sublane multiple per itemsize (packing)


def fbeta_loss(logits, labels, *, beta=1.0, small_value=1e-6,
               compute_in_bf16=False, tile_rows=None, tile_cols=None):
    """JAX/Pallas equivalent of FbetaLoss.forward(logits, labels).

    logits, labels: (B, C) arrays (labels may be f32/bf16/int8 0/1 values).
    Returns a float32 scalar = 1 - mean F-beta.

    compute_in_bf16=True casts logits/labels to bf16 before streaming (halves
    HBM bytes, ~1e-3 relative error on sigmoid). Default is False: inputs are
    streamed in their native dtype, so results match the f32 PyTorch module.
    """
    assert logits.shape == labels.shape and logits.ndim == 2
    B, C = logits.shape

    if compute_in_bf16:
        logits = logits.astype(jnp.bfloat16)
        labels = labels.astype(jnp.bfloat16)

    it_log = jnp.dtype(logits.dtype).itemsize
    it_lab = jnp.dtype(labels.dtype).itemsize
    sub = max(_SUBLANE.get(it_log, 8), _SUBLANE.get(it_lab, 8))

    # ---- generation-aware VMEM budget -------------------------------------
    try:
        vmem_cap = int(pltpu.get_tpu_info().vmem_capacity_bytes)
    except Exception:
        vmem_cap = 64 * 1024 * 1024  # conservative fallback (v7x-sized)
    if vmem_cap <= 64 * 1024 * 1024:        # v7x: 64 MiB per TensorCore
        vmem_limit = 48 * 1024 * 1024
    else:                                    # v5e / v6e: 128 MiB
        vmem_limit = 64 * 1024 * 1024
    budget = vmem_limit - 8 * 1024 * 1024    # headroom for Mosaic scratch

    # Per-element footprint: double-buffered input blocks (2x each input) plus
    # ~4 live f32 (TB, TC) temporaries (x, l, p, l*p).
    bpe = 2 * (it_log + it_lab) + 16
    # Per-row footprint of lane-padded (TB, 1) f32 buffers:
    # 3 accumulators + 2 output pipeline buffers, each padded to 128 lanes.
    row_extra = 5 * 128 * 4

    # ---- column tiling ------------------------------------------------------
    if tile_cols is not None:
        TC = int(tile_cols)
        assert TC == C or TC % 128 == 0, "tile_cols must be C or a multiple of 128"
    else:
        max_tile_elems = max(sub * 128, (budget - sub * row_extra) // bpe)
        if C * sub <= max_tile_elems:
            TC = C  # full-C blocks (typical case)
        else:
            # Vocab-scale C: tile the class axis so TB*TC stays within budget.
            TC = max(128, _round_down(max_tile_elems // sub, 128))
            TC = min(TC, C)

    # ---- row tiling ---------------------------------------------------------
    bytes_per_row = TC * bpe + row_extra
    tb_cap = max(sub, _round_down(budget // bytes_per_row, sub))
    if tile_rows is not None:
        TB = int(tile_rows)
        assert TB == B or TB % sub == 0, "tile_rows must be B or a multiple of sublane packing"
    else:
        # Target >= ~2 MiB of HBM traffic per input per grid step (amortizes
        # the ~0.35 us per-step overhead), subject to the VMEM cap.
        step_target = 4 * 1024 * 1024
        target_rows = _round_up(
            max(1, step_target // max(1, TC * (it_log + it_lab))), sub)
        TB = min(tb_cap, target_rows)
        if TB >= B:
            if B >= 2 * sub:
                # Never collapse to a single grid step when we can legally
                # split: >=2 row tiles lets both v7x TensorCores participate.
                TB = _round_up(-(-B // 2), sub)
            else:
                TB = B  # single full-array block (always a legal block shape)

    num_row_tiles = pl.cdiv(B, TB)
    num_col_tiles = pl.cdiv(C, TC)
    B_pad = num_row_tiles * TB

    kernel = _make_fbeta_kernel(beta, small_value, C, TC)

    cost = pl.CostEstimate(
        flops=6 * B * C,
        transcendentals=B * C,
        bytes_accessed=B * C * (it_log + it_lab) + B_pad * 4,
    )

    fs_all = pl.pallas_call(
        kernel,
        out_shape=jax.ShapeDtypeStruct((B_pad, 1), jnp.float32),
        grid_spec=pltpu.PrefetchScalarGridSpec(
            num_scalar_prefetch=0,
            grid=(num_row_tiles, num_col_tiles),
            in_specs=[
                pl.BlockSpec((TB, TC), lambda i, j: (i, j)),
                pl.BlockSpec((TB, TC), lambda i, j: (i, j)),
            ],
            out_specs=pl.BlockSpec((TB, 1), lambda i, j: (i, 0)),
            scratch_shapes=[pltpu.VMEM((TB, 1), jnp.float32)] * 3,
        ),
        compiler_params=pltpu.CompilerParams(
            dimension_semantics=("parallel", "arbitrary"),
            vmem_limit_bytes=vmem_limit,
        ),
        cost_estimate=cost,
    )(logits, labels)

    # Drop ragged-row padding (may contain garbage/NaN) and finish the tiny
    # reduction + (1 - mean) in XLA.
    fs = fs_all[:B, 0]
    return (1.0 - jnp.sum(fs) / B).astype(jnp.float32)


def fbeta_loss_ref(logits, labels, *, beta=1.0, small_value=1e-6):
    """Pure-JAX reference mirroring the PyTorch module (f32 math)."""
    beta2 = beta * beta
    B = logits.shape[0]
    p = jax.nn.sigmoid(logits.astype(jnp.float32))
    l = labels.astype(jnp.float32)
    num_pos = jnp.sum(p, axis=1) + small_value
    num_pos_hat = jnp.sum(l, axis=1) + small_value
    tp = jnp.sum(l * p, axis=1)
    precise = tp / num_pos
    recall = tp / num_pos_hat
    fs = (1 + beta2) * precise * recall / (beta2 * precise + recall + small_value)
    return 1.0 - jnp.sum(fs) / B


if __name__ == "__main__":
    key = jax.random.PRNGKey(0)
    k1, k2, k3, k4, k5, k6 = jax.random.split(key, 6)

    # Test 1: small aligned shape, default f32 streaming path — validates
    # parity with the f32 PyTorch module.
    B, C = 8, 128
    logits = jax.random.normal(k1, (B, C), dtype=jnp.float32)
    labels = (jax.random.uniform(k2, (B, C)) > 0.5).astype(jnp.float32)
    out = jax.block_until_ready(fbeta_loss(logits, labels, beta=1.0))
    ref = fbeta_loss_ref(logits, labels, beta=1.0)
    assert jnp.allclose(out, ref, atol=1e-5, rtol=1e-5), (out, ref)

    # Test 2: multi row-tile path with compact int8 labels (own BlockSpec,
    # cast to f32 inside the kernel); auto tiling keeps >=2 row tiles.
    B2, C2 = 64, 256
    logits2 = jax.random.normal(k3, (B2, C2), dtype=jnp.float32)
    labels2_i8 = (jax.random.uniform(k4, (B2, C2)) > 0.5).astype(jnp.int8)
    out2 = jax.block_until_ready(fbeta_loss(logits2, labels2_i8, beta=2.0))
    ref2 = fbeta_loss_ref(logits2, labels2_i8.astype(jnp.float32), beta=2.0)
    assert jnp.allclose(out2, ref2, atol=1e-5, rtol=1e-5), (out2, ref2)

    # Test 3: class-axis (reduction) tiling with a ragged last column tile —
    # exercises the accumulator + pl.when init/finalize and the column mask.
    B3, C3 = 16, 320
    logits3 = jax.random.normal(k5, (B3, C3), dtype=jnp.float32)
    labels3 = (jax.random.uniform(k6, (B3, C3)) > 0.5).astype(jnp.float32)
    out3 = jax.block_until_ready(
        fbeta_loss(logits3, labels3, beta=0.5, tile_rows=8, tile_cols=128))
    ref3 = fbeta_loss_ref(logits3, labels3, beta=0.5)
    assert jnp.allclose(out3, ref3, atol=1e-5, rtol=1e-5), (out3, ref3)

    # Test 4: explicit bf16 bandwidth trade-off — compared against a reference
    # on the same bf16-quantized inputs (documented accuracy trade).
    out4 = jax.block_until_ready(
        fbeta_loss(logits, labels, beta=1.0, compute_in_bf16=True))
    ref4 = fbeta_loss_ref(logits.astype(jnp.bfloat16).astype(jnp.float32),
                          labels.astype(jnp.bfloat16).astype(jnp.float32),
                          beta=1.0)
    assert jnp.allclose(out4, ref4, atol=1e-4, rtol=1e-4), (out4, ref4)

    print("KERNEL_OK")
</pallas_src>

<mosaic_0001>
module attributes {stable_mosaic.version = 11 : i64} {
  func.func @kernel(%arg0: i32, %arg1: i32, %arg2: memref<8x128xf32, #tpu.memory_space<vmem>>, %arg3: memref<8x128xf32, #tpu.memory_space<vmem>>, %arg4: memref<8x1xf32, #tpu.memory_space<vmem>>, %arg5: memref<8x1xf32, #tpu.memory_space<vmem>>, %arg6: memref<8x1xf32, #tpu.memory_space<vmem>>, %arg7: memref<8x1xf32, #tpu.memory_space<vmem>>) attributes {dimension_semantics = [#tpu.dimension_semantics<parallel>, #tpu.dimension_semantics<arbitrary>], iteration_bounds = array<i64: 1, 1>, scalar_prefetch = 0 : i64, scratch_operands = 3 : i64, tpu.core_type = #tpu.core_type<tc>, window_params = [{transform_indices = @transform_0, window_bounds = array<i64: 8, 128>}, {transform_indices = @transform_1, window_bounds = array<i64: 8, 128>}, {transform_indices = @transform_2, window_bounds = array<i64: 8, 1>}]} {
    %c0_i32 = arith.constant 0 : i32
    %0 = arith.cmpi eq, %arg1, %c0_i32 : i32
    %1 = arith.extui %0 : i1 to i32
    %c0_i32_0 = arith.constant 0 : i32
    %2 = arith.cmpi ne, %1, %c0_i32_0 : i32
    scf.if %2 {
      %cst_21 = arith.constant 0.000000e+00 : f32
      %29 = vector.broadcast %cst_21 : f32 to vector<8x1xf32>
      %c0_22 = arith.constant 0 : index
      %c0_23 = arith.constant 0 : index
      %30 = vector.load %arg5[%c0_22, %c0_23] : memref<8x1xf32, #tpu.memory_space<vmem>>, vector<8x1xf32>
      tpu.vector_store %arg5[%c0_22, %c0_23], %29 {strides = array<i32>} : memref<8x1xf32, #tpu.memory_space<vmem>>, vector<8x1xf32>,
      %cst_24 = arith.constant 0.000000e+00 : f32
      %31 = vector.broadcast %cst_24 : f32 to vector<8x1xf32>
      %c0_25 = arith.constant 0 : index
      %c0_26 = arith.constant 0 : index
      %32 = vector.load %arg6[%c0_25, %c0_26] : memref<8x1xf32, #tpu.memory_space<vmem>>, vector<8x1xf32>
      tpu.vector_store %arg6[%c0_25, %c0_26], %31 {strides = array<i32>} : memref<8x1xf32, #tpu.memory_space<vmem>>, vector<8x1xf32>,
      %cst_27 = arith.constant 0.000000e+00 : f32
      %33 = vector.broadcast %cst_27 : f32 to vector<8x1xf32>
      %c0_28 = arith.constant 0 : index
      %c0_29 = arith.constant 0 : index
      %34 = vector.load %arg7[%c0_28, %c0_29] : memref<8x1xf32, #tpu.memory_space<vmem>>, vector<8x1xf32>
      tpu.vector_store %arg7[%c0_28, %c0_29], %33 {strides = array<i32>} : memref<8x1xf32, #tpu.memory_space<vmem>>, vector<8x1xf32>,
    } else {
    }
    %c0 = arith.constant 0 : index
    %c0_1 = arith.constant 0 : index
    %3 = vector.load %arg2[%c0, %c0_1] : memref<8x128xf32, #tpu.memory_space<vmem>>, vector<8x128xf32>
    %c0_2 = arith.constant 0 : index
    %c0_3 = arith.constant 0 : index
    %4 = vector.load %arg3[%c0_2, %c0_3] : memref<8x128xf32, #tpu.memory_space<vmem>>, vector<8x128xf32>
    %5 = arith.negf %3 : vector<8x128xf32>
    %6 = math.exp %5 : vector<8x128xf32>
    %cst = arith.constant 1.000000e+00 : f32
    %7 = vector.broadcast %cst : f32 to vector<8x128xf32>
    %8 = arith.addf %7, %6 : vector<8x128xf32>
    %9 = arith.divf %7, %8 : vector<8x128xf32>
    %c0_4 = arith.constant 0 : index
    %c0_5 = arith.constant 0 : index
    %10 = vector.load %arg5[%c0_4, %c0_5] : memref<8x1xf32, #tpu.memory_space<vmem>>, vector<8x1xf32>
    %cst_6 = arith.constant dense<0.000000e+00> : vector<8xf32>
    %11 = vector.multi_reduction <add>, %9, %cst_6 [1] : vector<8x128xf32> to vector<8xf32>
    %12 = vector.shape_cast %11 : vector<8xf32> to vector<8x1xf32>
    %13 = arith.addf %10, %12 : vector<8x1xf32>
    %c0_7 = arith.constant 0 : index
    %c0_8 = arith.constant 0 : index
    %14 = vector.load %arg5[%c0_7, %c0_8] : memref<8x1xf32, #tpu.memory_space<vmem>>, vector<8x1xf32>
    tpu.vector_store %arg5[%c0_7, %c0_8], %13 {strides = array<i32>} : memref<8x1xf32, #tpu.memory_space<vmem>>, vector<8x1xf32>,
    %c0_9 = arith.constant 0 : index
    %c0_10 = arith.constant 0 : index
    %15 = vector.load %arg6[%c0_9, %c0_10] : memref<8x1xf32, #tpu.memory_space<vmem>>, vector<8x1xf32>
    %cst_11 = arith.constant dense<0.000000e+00> : vector<8xf32>
    %16 = vector.multi_reduction <add>, %4, %cst_11 [1] : vector<8x128xf32> to vector<8xf32>
    %17 = vector.shape_cast %16 : vector<8xf32> to vector<8x1xf32>
    %18 = arith.addf %15, %17 : vector<8x1xf32>
    %c0_12 = arith.constant 0 : index
    %c0_13 = arith.constant 0 : index
    %19 = vector.load %arg6[%c0_12, %c0_13] : memref<8x1xf32, #tpu.memory_space<vmem>>, vector<8x1xf32>
    tpu.vector_store %arg6[%c0_12, %c0_13], %18 {strides = array<i32>} : memref<8x1xf32, #tpu.memory_space<vmem>>, vector<8x1xf32>,
    %c0_14 = arith.constant 0 : index
    %c0_15 = arith.constant 0 : index
    %20 = vector.load %arg7[%c0_14, %c0_15] : memref<8x1xf32, #tpu.memory_space<vmem>>, vector<8x1xf32>
    %21 = arith.mulf %4, %9 : vector<8x128xf32>
    %cst_16 = arith.constant dense<0.000000e+00> : vector<8xf32>
    %22 = vector.multi_reduction <add>, %21, %cst_16 [1] : vector<8x128xf32> to vector<8xf32>
    %23 = vector.shape_cast %22 : vector<8xf32> to vector<8x1xf32>
    %24 = arith.addf %20, %23 : vector<8x1xf32>
    %c0_17 = arith.constant 0 : index
    %c0_18 = arith.constant 0 : index
    %25 = vector.load %arg7[%c0_17, %c0_18] : memref<8x1xf32, #tpu.memory_space<vmem>>, vector<8x1xf32>
    tpu.vector_store %arg7[%c0_17, %c0_18], %24 {strides = array<i32>} : memref<8x1xf32, #tpu.memory_space<vmem>>, vector<8x1xf32>,
    %c0_i32_19 = arith.constant 0 : i32
    %26 = arith.cmpi eq, %arg1, %c0_i32_19 : i32
    %27 = arith.extui %26 : i1 to i32
    %c0_i32_20 = arith.constant 0 : i32
    %28 = arith.cmpi ne, %27, %c0_i32_20 : i32
    scf.if %28 {
      %c0_21 = arith.constant 0 : index
      %c0_22 = arith.constant 0 : index
      %29 = vector.load %arg5[%c0_21, %c0_22] : memref<8x1xf32, #tpu.memory_space<vmem>>, vector<8x1xf32>
      %cst_23 = arith.constant 9.99999997E-7 : f32
      %30 = vector.broadcast %cst_23 : f32 to vector<8x1xf32>
      %31 = arith.addf %29, %30 : vector<8x1xf32>
      %c0_24 = arith.constant 0 : index
      %c0_25 = arith.constant 0 : index
      %32 = vector.load %arg6[%c0_24, %c0_25] : memref<8x1xf32, #tpu.memory_space<vmem>>, vector<8x1xf32>
      %cst_26 = arith.constant 9.99999997E-7 : f32
      %33 = vector.broadcast %cst_26 : f32 to vector<8x1xf32>
      %34 = arith.addf %32, %33 : vector<8x1xf32>
      %c0_27 = arith.constant 0 : index
      %c0_28 = arith.constant 0 : index
      %35 = vector.load %arg7[%c0_27, %c0_28] : memref<8x1xf32, #tpu.memory_space<vmem>>, vector<8x1xf32>
      %36 = arith.divf %35, %31 : vector<8x1xf32>
      %37 = arith.divf %35, %34 : vector<8x1xf32>
      %cst_29 = arith.constant 2.000000e+00 : f32
      %38 = vector.broadcast %cst_29 : f32 to vector<8x1xf32>
      %39 = arith.mulf %38, %36 : vector<8x1xf32>
      %40 = arith.mulf %39, %37 : vector<8x1xf32>
      %cst_30 = arith.constant 1.000000e+00 : f32
      %41 = vector.broadcast %cst_30 : f32 to vector<8x1xf32>
      %42 = arith.mulf %41, %36 : vector<8x1xf32>
      %43 = arith.addf %42, %37 : vector<8x1xf32>
      %cst_31 = arith.constant 9.99999997E-7 : f32
      %44 = vector.broadcast %cst_31 : f32 to vector<8x1xf32>
      %45 = arith.addf %43, %44 : vector<8x1xf32>
      %46 = arith.divf %40, %45 : vector<8x1xf32>
      %c0_32 = arith.constant 0 : index
      %c0_33 = arith.constant 0 : index
      %47 = vector.load %arg4[%c0_32, %c0_33] : memref<8x1xf32, #tpu.memory_space<vmem>>, vector<8x1xf32>
      tpu.vector_store %arg4[%c0_32, %c0_33], %46 {strides = array<i32>} : memref<8x1xf32, #tpu.memory_space<vmem>>, vector<8x1xf32>,
    } else {
    }
    return
  }
  func.func @transform_0(%arg0: i32, %arg1: i32) -> (i32, i32) {
    %c0_i32 = arith.constant 0 : i32
    return %arg0, %arg1 : i32, i32
  }
  func.func @transform_1(%arg0: i32, %arg1: i32) -> (i32, i32) {
    %c0_i32 = arith.constant 0 : i32
    return %arg0, %arg1 : i32, i32
  }
  func.func @transform_2(%arg0: i32, %arg1: i32) -> (i32, i32) {
    %c0_i32 = arith.constant 0 : i32
    %c0_i32_0 = arith.constant 0 : i32
    return %arg0, %c0_i32 : i32, i32
  }
}

</mosaic_0001>

<llo_original>
// kernel: tpu_custom_call.1
$region0: #{tpu_custom_call.1}
  #allocation0 [shape = 'u32[]', space=smem, size = 0x4, offset = 0x4, fixed_abs, tag = 'smem constant byte address 0x4 - core index']
  #allocation1 [shape = 'u32[144,128]{1,0:T(1,128)}', space=vmem, size = 0x12000, scoped, tag = 'internal scratch']
  #allocation2 [shape = 'f32[8,1]{1,0:T(8,128)}', space=vmem, size = 0x1000, scoped, tag = 'scratch operand']
  #allocation3 [shape = 'f32[8,1]{1,0:T(8,128)}', space=vmem, size = 0x1000, scoped, tag = 'scratch operand']
  #allocation4 [shape = 'f32[8,1]{1,0:T(8,128)}', space=vmem, size = 0x1000, scoped, tag = 'scratch operand']
  %s0 = inlined_call_operand.hbm [shape: f32[8,128], index: 0, kind: input, shape index: {}]
  %s1 = inlined_call_operand.hbm [shape: f32[8,128], index: 1, kind: input, shape index: {}]
  %s2 = inlined_call_operand.vmem [shape: f32[8,1], index: 2, kind: output, shape index: {}]
  %s3 = sld [smem:[#allocation0]]
  $region34: #{tpu_custom_call.1} parent=0
    _
  %s5 = ssub.s32 1, %s3
  %s6 = scalar_select 0, %s5, %s3
  $region1: #{tpu_custom_call.1} parent=0
    #allocation5 [shape = 'u8[4096]{0}', space=vmem, size = 0x1000, scoped, tag = 'input window, operand 0, single buffered']
    #allocation6 [shape = 's32[1]{0}', space=sflag, size = 0x4, scoped, tag = 'scoped memory for tpu_custom_call.1']
    #allocation7 [shape = 'u8[4096]{0}', space=vmem, size = 0x1000, scoped, tag = 'input window, operand 1, single buffered']
    #allocation8 [shape = 's32[1]{0}', space=sflag, size = 0x4, scoped, tag = 'scoped memory for tpu_custom_call.1']
    %7 = vsyncpa [#allocation6], 0
    %8 = vsyncpa [#allocation8], 0
    // Predicated region
    $region2: #{tpu_custom_call.1} parent=1 // pred_check
      _
    $region3: #{tpu_custom_call.1} parent=1 // pred_check_branch
      %10 = sbr.rel (0) target = $region5
    $region4: #{tpu_custom_call.1} parent=1 // pred_region
      %s12 = ssub.s32 128, 128
      %13 = vsyncadd [#allocation6], %s12
      %s15 = sshll.u32 [#allocation5], 4
      %s16 = int_to_ptr.vmem [resolvable:$true] %s15
      %18 = dma.hbm_to_vmem [thread:$0]  %s0, 128, %s16, [#allocation6]
    $region5: #{tpu_custom_call.1} parent=1 // pred_fallthru
      _
    // Predicated region
    $region6: #{tpu_custom_call.1} parent=1 // pred_check
      _
    $region7: #{tpu_custom_call.1} parent=1 // pred_check_branch
      %20 = sbr.rel (0) target = $region9
    $region8: #{tpu_custom_call.1} parent=1 // pred_region
      %s22 = ssub.s32 128, 128
      %23 = vsyncadd [#allocation8], %s22
      %s25 = sshll.u32 [#allocation7], 4
      %s26 = int_to_ptr.vmem [resolvable:$true] %s25
      %28 = dma.hbm_to_vmem [thread:$0]  %s1, 128, %s26, [#allocation8]
    $region9: #{tpu_custom_call.1} parent=1 // pred_fallthru
      _
    // Predicated region
    $region10: #{tpu_custom_call.1} parent=1 // pred_check
      _
    $region11: #{tpu_custom_call.1} parent=1 // pred_check_branch
      %30 = sbr.rel (0) target = $region13
    $region12: #{tpu_custom_call.1} parent=1 // pred_region
      %31 = dma.done [#allocation6], 128
    $region13: #{tpu_custom_call.1} parent=1 // pred_fallthru
      _
    // Predicated region
    $region14: #{tpu_custom_call.1} parent=1 // pred_check
      _
    $region15: #{tpu_custom_call.1} parent=1 // pred_check_branch
      %33 = sbr.rel (0) target = $region17
    $region16: #{tpu_custom_call.1} parent=1 // pred_region
      %34 = dma.done [#allocation8], 128
    $region17: #{tpu_custom_call.1} parent=1 // pred_fallthru
      _
    %p35 = scmp.eq.s32.totalorder 0, 0
    // Predicated region
    $region18: #{tpu_custom_call.1} parent=1 // pred_check
      %p36 = pneg %p35
    $region19: #{tpu_custom_call.1} parent=1 // pred_check_branch
      %38 = sbr.rel (%p36) target = $region21
    $region20: #{tpu_custom_call.1} parent=1 // pred_region
      %vm39 = vcmask 7168
      %40 = vst.msk [vmem:[#allocation2] sm:$0xff] %vm39, 0.0
      %41 = vst.msk [vmem:[#allocation3] sm:$0xff] %vm39, 0.0
      %42 = vst.msk [vmem:[#allocation4] sm:$0xff] %vm39, 0.0
    $region21: #{tpu_custom_call.1} parent=1 // pred_fallthru
      _
    %v43 = vld [vmem:[#allocation5] sm:$0xff]
    %v44 = vld [vmem:[#allocation7] sm:$0xff]
    %v45 = vxor.u32 %v43, 2147483648
    %v46 = vmul.f32 %v45, 1.442695
    %v47 = vpow.pop %v46
    %v48 = vadd.f32 %v47, 1.0
    %v49 = vrcp.pop %v48
    %v50 = vmul.f32 1.0, %v49
    %v51 = vld [vmem:[#allocation2] sm:$0xff]
    %52 = vadd.xlane.f32.xlu0 %v50
    %v53 = vpop.xlane.xlu0 %52
    %v54 = vadd.f32 %v51, %v53
    %vm55 = vcmask 7168
    %56 = vst.msk [vmem:[#allocation2] sm:$0xff] %vm55, %v54
    %v57 = vld [vmem:[#allocation3] sm:$0xff]
    %58 = vadd.xlane.f32.xlu0 %v44
    %v59 = vpop.xlane.xlu0 %58
    %v60 = vadd.f32 %v57, %v59
    %61 = vst.msk [vmem:[#allocation3] sm:$0xff] %vm55, %v60
    %v62 = vld [vmem:[#allocation4] sm:$0xff]
    %v63 = vmul.f32 %v44, %v50
    %64 = vadd.xlane.f32.xlu0 %v63
    %v65 = vpop.xlane.xlu0 %64
    %v66 = vadd.f32 %v62, %v65
    %67 = vst.msk [vmem:[#allocation4] sm:$0xff] %vm55, %v66
    // Predicated region
    $region22: #{tpu_custom_call.1} parent=1 // pred_check
      %p68 = pneg %p35
    $region23: #{tpu_custom_call.1} parent=1 // pred_check_branch
      %70 = sbr.rel (%p68) target = $region25
    $region24: #{tpu_custom_call.1} parent=1 // pred_region
      %v71 = vld [vmem:[#allocation2] sm:$0xff]
      %v72 = vadd.f32 %v71, 1e-06
      %v73 = vld [vmem:[#allocation3] sm:$0xff]
      %v74 = vadd.f32 %v73, 1e-06
      %v75 = vld [vmem:[#allocation4] sm:$0xff]
      %v76 = vrcp.pop %v72
      %v77 = vmul.f32 %v75, %v76
      %v78 = vrcp.pop %v74
      %v79 = vmul.f32 %v75, %v78
      %v80 = vmul.f32 %v77, 2.0
      %v81 = vmul.f32 %v80, %v79
      %v82 = vadd.f32 %v77, %v79
      %v83 = vadd.f32 %v82, 1e-06
      %v84 = vrcp.pop %v83
      %v85 = vmul.f32 %v81, %v84
      %86 = vst.msk [vmem:[%s2] sm:$0xff] %vm55, %v85
    $region25: #{tpu_custom_call.1} parent=1 // pred_fallthru
      _
    // Predicated region
    $region26: #{tpu_custom_call.1} parent=1 // pred_check
      _
    $region27: #{tpu_custom_call.1} parent=1 // pred_check_branch
      %88 = sbr.rel (0) target = $region29
    $region28: #{tpu_custom_call.1} parent=1 // pred_region
      _
    $region29: #{tpu_custom_call.1} parent=1 // pred_fallthru
      _
    // Predicated region
    $region30: #{tpu_custom_call.1} parent=1 // pred_check
      _
    $region31: #{tpu_custom_call.1} parent=1 // pred_check_branch
      %90 = sbr.rel (0) target = $region33
    $region32: #{tpu_custom_call.1} parent=1 // pred_region
      _
    $region33: #{tpu_custom_call.1} parent=1 // pred_fallthru
      _
    %91 = vsyncpa [#allocation6], 1
    %92 = vsyncpa [#allocation8], 1

</llo_original>
